<compile_context>
chip_gen: v7x
topology: tpu7x:2x2x1
jax: 0.10.0
libtpu: 0.0.40
codegen_flags: <defaults>
</compile_context>

<pallas_src>
import math

import jax
import jax.numpy as jnp
import numpy as np
from jax.experimental import pallas as pl
from jax.experimental.pallas import tpu as pltpu

# ----------------------------- hyper-params ----------------------------------
NEAR_INF = 1e20          # ParlAI's NEAR_INF constant
HSZ = 32                 # hiddensize
EMB = 32                 # embeddingsize
INPUT_DIM = HSZ          # attn_time='post'  -> input_dim = hsz
HSZ_X_DIRS = HSZ         # unidirectional    -> hszXdirs = hsz
NUM_LAYERS = 2
BSZ = 4
SEQLEN = 8
SUBLANE = 8              # f32 sublane tile; batch is padded up to this


# ------------------------------ Pallas kernel ---------------------------------
def _general_attention_kernel(xes_ref, hid_ref, enc_ref, mask_ref,
                              wattn_t_ref, wcomb_x_t_ref, wcomb_a_t_ref,
                              out_ref, attn_w_ref):
    """Single-invocation 'general' attention; everything resident in VMEM."""
    xes = xes_ref[...]              # (Bp, D)
    last_hidden = hid_ref[...]      # (Bp, H)
    enc = enc_ref[...]              # (Bp, T, Hd)
    mask = mask_ref[...]            # (Bp, T)  1.0 = valid token, 0.0 = pad

    # 'general' attention: project the decoder hidden state, then score it
    # against every encoder timestep.
    proj = jnp.dot(last_hidden, wattn_t_ref[...],
                   preferred_element_type=jnp.float32)            # (Bp, Hd)
    scores = jnp.sum(proj[:, None, :] * enc, axis=-1)              # (Bp, T)
    scores = jnp.where(mask > 0.5, scores, -NEAR_INF)              # masked_fill

    # softmax over the sequence axis (numerically stable; padded batch rows
    # degrade to a uniform distribution, no NaNs).
    m = jnp.max(scores, axis=-1, keepdims=True)
    e = jnp.exp(scores - m)
    w = e / jnp.sum(e, axis=-1, keepdims=True)                     # (Bp, T)

    # context vector: weighted sum of encoder states.
    ctx = jnp.sum(w[:, :, None] * enc, axis=1)                     # (Bp, Hd)

    # attn_combine (bias-free Linear on cat([xes, ctx])) as two fused matmuls,
    # avoiding an in-kernel lane concat.
    merged = (jnp.dot(xes, wcomb_x_t_ref[...], preferred_element_type=jnp.float32)
              + jnp.dot(ctx, wcomb_a_t_ref[...], preferred_element_type=jnp.float32))
    out_ref[...] = jnp.tanh(merged)                                # (Bp, D)
    attn_w_ref[...] = w                                            # (Bp, T)


# ------------------------------ wrapper (glue) ---------------------------------
def _pad_batch(x, bp):
    pad = bp - x.shape[0]
    if pad == 0:
        return x
    return jnp.pad(x, ((0, pad),) + ((0, 0),) * (x.ndim - 1))


def attention_layer_forward(xes, hidden, attn_params, params, attn_type="general"):
    """Mirror of AttentionLayer.forward for attn_type in {'none', 'general'}."""
    if attn_type == "none":
        return xes, None
    if attn_type != "general":
        # TODO(synk): 'local'/'concat'/'dot' branches not implemented in Pallas.
        raise NotImplementedError(attn_type)

    if isinstance(hidden, tuple):
        hidden = hidden[0]
    last_hidden = hidden[-1]                                 # (bsz, hsz)
    enc_out, attn_mask = attn_params                         # (bsz,T,Hd), (bsz,T) bool
    bsz, seqlen, hszXdirs = enc_out.shape
    input_dim = xes.shape[-1]

    xes_sq = jnp.reshape(xes, (bsz, input_dim)).astype(jnp.float32)

    # pad batch to the f32 sublane tile so every vreg is fully populated
    bp = ((bsz + SUBLANE - 1) // SUBLANE) * SUBLANE
    bp = max(bp, SUBLANE)
    xes_p = _pad_batch(xes_sq, bp)
    hid_p = _pad_batch(last_hidden.astype(jnp.float32), bp)
    enc_p = _pad_batch(enc_out.astype(jnp.float32), bp)
    mask_p = _pad_batch(attn_mask.astype(jnp.float32), bp)

    # pre-transpose / split weights so the kernel only does x @ W matmuls
    wattn_t = params["w_attn"].T                             # (hsz, hszXdirs)
    wc = params["w_combine"]                                 # (input_dim, input_dim+hszXdirs)
    wc_x_t = wc[:, :input_dim].T                             # (input_dim, input_dim)
    wc_a_t = wc[:, input_dim:].T                             # (hszXdirs, input_dim)

    vmem = pl.BlockSpec(memory_space=pltpu.MemorySpace.VMEM)
    out_p, w_p = pl.pallas_call(
        _general_attention_kernel,
        out_shape=(jax.ShapeDtypeStruct((bp, input_dim), jnp.float32),
                   jax.ShapeDtypeStruct((bp, seqlen), jnp.float32)),
        in_specs=[vmem] * 7,
        out_specs=(vmem, vmem),
    )(xes_p, hid_p, enc_p, mask_p, wattn_t, wc_x_t, wc_a_t)

    output = out_p[:bsz].reshape(bsz, 1, input_dim)
    attn_weights = w_p[:bsz]
    return output, attn_weights


# ------------------------------ reference (pure JAX) ---------------------------
def _ref_forward(xes, hidden, attn_params, params):
    if isinstance(hidden, tuple):
        hidden = hidden[0]
    last_hidden = hidden[-1]
    enc_out, attn_mask = attn_params
    bsz = enc_out.shape[0]

    hid = last_hidden @ params["w_attn"].T                   # (bsz, hszXdirs)
    premask = jnp.einsum("bd,btd->bt", hid, enc_out)         # (bsz, T)
    premask = jnp.where(attn_mask, premask, -NEAR_INF)
    attn_weights = jax.nn.softmax(premask, axis=1)
    attn_applied = jnp.einsum("bt,btd->bd", attn_weights, enc_out)
    merged = jnp.concatenate([xes.reshape(bsz, -1), attn_applied], axis=1)
    output = jnp.tanh(merged @ params["w_combine"].T)[:, None, :]
    return output, attn_weights


# ------------------------------ param init ------------------------------------
def init_params(key):
    ks = jax.random.split(key, 2)
    u = lambda k, shape: jax.random.uniform(
        k, shape, jnp.float32, -1.0 / math.sqrt(shape[1]), 1.0 / math.sqrt(shape[1]))
    return {
        "w_attn": u(ks[0], (HSZ_X_DIRS, HSZ)),                       # self.attn
        "w_combine": u(ks[1], (INPUT_DIM, HSZ_X_DIRS + INPUT_DIM)),  # self.attn_combine
    }


if __name__ == "__main__":
    key = jax.random.PRNGKey(0)
    params = init_params(key)

    # deterministic example inputs
    k_xes, k_h, k_c, k_enc = jax.random.split(jax.random.fold_in(key, 7), 4)
    lengths = np.array([8, 6, 5, 3], dtype=np.int32)          # sorted descending
    pos = np.arange(SEQLEN)[None, :]
    attn_mask = jnp.asarray(pos < lengths[:, None])           # (BSZ, SEQLEN) bool

    xes = jax.random.normal(k_xes, (BSZ, 1, INPUT_DIM), jnp.float32)
    h = jax.random.normal(k_h, (NUM_LAYERS, BSZ, HSZ), jnp.float32)
    c = jax.random.normal(k_c, (NUM_LAYERS, BSZ, HSZ), jnp.float32)
    enc_out = jax.random.normal(k_enc, (BSZ, SEQLEN, HSZ_X_DIRS), jnp.float32)
    enc_out = enc_out * attn_mask[:, :, None].astype(jnp.float32)   # zero-padded encoder

    output, attn_weights = attention_layer_forward(
        xes, (h, c), (enc_out, attn_mask), params, attn_type="general")
    jax.block_until_ready((output, attn_weights))

    # quiet correctness check against the pure-JAX reference
    ref_out, ref_w = _ref_forward(xes, (h, c), (enc_out, attn_mask), params)
    np.testing.assert_allclose(np.asarray(output), np.asarray(ref_out),
                               rtol=1e-4, atol=1e-5)
    np.testing.assert_allclose(np.asarray(attn_weights), np.asarray(ref_w),
                               rtol=1e-4, atol=1e-5)
    assert output.shape == (BSZ, 1, INPUT_DIM)
    assert attn_weights.shape == (BSZ, SEQLEN)
    # padded positions must receive zero attention
    assert float(jnp.max(jnp.where(attn_mask, 0.0, attn_weights))) < 1e-7

    print("KERNEL_OK")
</pallas_src>

<mosaic_0001>
module attributes {stable_mosaic.version = 11 : i64} {
  func.func @_general_attention_kernel(%arg0: memref<8x32xf32, #tpu.memory_space<vmem>>, %arg1: memref<8x32xf32, #tpu.memory_space<vmem>>, %arg2: memref<8x8x32xf32, #tpu.memory_space<vmem>>, %arg3: memref<8x8xf32, #tpu.memory_space<vmem>>, %arg4: memref<32x32xf32, #tpu.memory_space<vmem>>, %arg5: memref<32x32xf32, #tpu.memory_space<vmem>>, %arg6: memref<32x32xf32, #tpu.memory_space<vmem>>, %arg7: memref<8x32xf32, #tpu.memory_space<vmem>>, %arg8: memref<8x8xf32, #tpu.memory_space<vmem>>) attributes {dimension_semantics = [], scalar_prefetch = 0 : i64, scratch_operands = 0 : i64, tpu.core_type = #tpu.core_type<tc>} {
    %c0 = arith.constant 0 : index
    %c0_0 = arith.constant 0 : index
    %0 = vector.load %arg0[%c0, %c0_0] : memref<8x32xf32, #tpu.memory_space<vmem>>, vector<8x32xf32>
    %c0_1 = arith.constant 0 : index
    %c0_2 = arith.constant 0 : index
    %1 = vector.load %arg1[%c0_1, %c0_2] : memref<8x32xf32, #tpu.memory_space<vmem>>, vector<8x32xf32>
    %c0_3 = arith.constant 0 : index
    %c0_4 = arith.constant 0 : index
    %c0_5 = arith.constant 0 : index
    %2 = vector.load %arg2[%c0_3, %c0_4, %c0_5] : memref<8x8x32xf32, #tpu.memory_space<vmem>>, vector<8x8x32xf32>
    %c0_6 = arith.constant 0 : index
    %c0_7 = arith.constant 0 : index
    %3 = vector.load %arg3[%c0_6, %c0_7] : memref<8x8xf32, #tpu.memory_space<vmem>>, vector<8x8xf32>
    %c0_8 = arith.constant 0 : index
    %c0_9 = arith.constant 0 : index
    %4 = vector.load %arg4[%c0_8, %c0_9] : memref<32x32xf32, #tpu.memory_space<vmem>>, vector<32x32xf32>
    %cst = arith.constant dense<0.000000e+00> : vector<8x32xf32>
    %5 = tpu.matmul %1, %4, %cst {dimension_numbers = #tpu.dot_dimension_numbers<[1], [0], [0], [1], [0, 0, 1, 1], [], []>} : vector<8x32xf32>, vector<32x32xf32>, vector<8x32xf32> -> vector<8x32xf32>
    %6 = vector.shape_cast %5 : vector<8x32xf32> to vector<8x1x32xf32>
    %7 = vector.broadcast %6 : vector<8x1x32xf32> to vector<8x8x32xf32>
    %8 = arith.mulf %7, %2 : vector<8x8x32xf32>
    %cst_10 = arith.constant dense<0.000000e+00> : vector<8x8xf32>
    %9 = vector.multi_reduction <add>, %8, %cst_10 [2] : vector<8x8x32xf32> to vector<8x8xf32>
    %cst_11 = arith.constant 5.000000e-01 : f32
    %10 = vector.broadcast %cst_11 : f32 to vector<8x8xf32>
    %11 = arith.cmpf ogt, %3, %10 : vector<8x8xf32>
    %cst_12 = arith.constant -1.000000e+20 : f32
    %12 = vector.broadcast %cst_12 : f32 to vector<8x8xf32>
    %13 = arith.select %11, %9, %12 : vector<8x8xi1>, vector<8x8xf32>
    %cst_13 = arith.constant dense<0xFF800000> : vector<8xf32>
    %14 = vector.multi_reduction <maximumf>, %13, %cst_13 [1] : vector<8x8xf32> to vector<8xf32>
    %15 = vector.shape_cast %14 : vector<8xf32> to vector<8x1xf32>
    %16 = vector.broadcast %15 : vector<8x1xf32> to vector<8x8xf32>
    %17 = arith.subf %13, %16 : vector<8x8xf32>
    %18 = math.exp %17 : vector<8x8xf32>
    %cst_14 = arith.constant dense<0.000000e+00> : vector<8xf32>
    %19 = vector.multi_reduction <add>, %18, %cst_14 [1] : vector<8x8xf32> to vector<8xf32>
    %20 = vector.shape_cast %19 : vector<8xf32> to vector<8x1xf32>
    %21 = vector.broadcast %20 : vector<8x1xf32> to vector<8x8xf32>
    %22 = arith.divf %18, %21 : vector<8x8xf32>
    %23 = vector.shape_cast %22 : vector<8x8xf32> to vector<8x8x1xf32>
    %24 = vector.broadcast %23 : vector<8x8x1xf32> to vector<8x8x32xf32>
    %25 = arith.mulf %24, %2 : vector<8x8x32xf32>
    %cst_15 = arith.constant dense<0.000000e+00> : vector<8x32xf32>
    %26 = vector.multi_reduction <add>, %25, %cst_15 [1] : vector<8x8x32xf32> to vector<8x32xf32>
    %c0_16 = arith.constant 0 : index
    %c0_17 = arith.constant 0 : index
    %27 = vector.load %arg5[%c0_16, %c0_17] : memref<32x32xf32, #tpu.memory_space<vmem>>, vector<32x32xf32>
    %cst_18 = arith.constant dense<0.000000e+00> : vector<8x32xf32>
    %28 = tpu.matmul %0, %27, %cst_18 {dimension_numbers = #tpu.dot_dimension_numbers<[1], [0], [0], [1], [0, 0, 1, 1], [], []>} : vector<8x32xf32>, vector<32x32xf32>, vector<8x32xf32> -> vector<8x32xf32>
    %c0_19 = arith.constant 0 : index
    %c0_20 = arith.constant 0 : index
    %29 = vector.load %arg6[%c0_19, %c0_20] : memref<32x32xf32, #tpu.memory_space<vmem>>, vector<32x32xf32>
    %cst_21 = arith.constant dense<0.000000e+00> : vector<8x32xf32>
    %30 = tpu.matmul %26, %29, %cst_21 {dimension_numbers = #tpu.dot_dimension_numbers<[1], [0], [0], [1], [0, 0, 1, 1], [], []>} : vector<8x32xf32>, vector<32x32xf32>, vector<8x32xf32> -> vector<8x32xf32>
    %31 = arith.addf %28, %30 : vector<8x32xf32>
    %32 = math.tanh %31 : vector<8x32xf32>
    %c0_22 = arith.constant 0 : index
    %c0_23 = arith.constant 0 : index
    %33 = vector.load %arg7[%c0_22, %c0_23] : memref<8x32xf32, #tpu.memory_space<vmem>>, vector<8x32xf32>
    tpu.vector_store %arg7[%c0_22, %c0_23], %32 {strides = array<i32>} : memref<8x32xf32, #tpu.memory_space<vmem>>, vector<8x32xf32>,
    %c0_24 = arith.constant 0 : index
    %c0_25 = arith.constant 0 : index
    %34 = vector.load %arg8[%c0_24, %c0_25] : memref<8x8xf32, #tpu.memory_space<vmem>>, vector<8x8xf32>
    tpu.vector_store %arg8[%c0_24, %c0_25], %22 {strides = array<i32>} : memref<8x8xf32, #tpu.memory_space<vmem>>, vector<8x8xf32>,
    return
  }
}

</mosaic_0001>

<llo_original>
// kernel: tpu_custom_call.1
$region0: #{tpu_custom_call.1}
  #allocation0 [shape = 'u32[]', space=smem, size = 0x4, offset = 0x4, fixed_abs, tag = 'smem constant byte address 0x4 - core index']
  #allocation1 [shape = 'u32[144,128]{1,0:T(1,128)}', space=vmem, size = 0x12000, scoped, tag = 'internal scratch']
  %s0 = inlined_call_operand.hbm [shape: f32[8,32], index: 0, kind: input, shape index: {}]
  %s1 = inlined_call_operand.hbm [shape: f32[8,32], index: 1, kind: input, shape index: {}]
  %s2 = inlined_call_operand.hbm [shape: f32[8,8,32], index: 2, kind: input, shape index: {}]
  %s3 = inlined_call_operand.vmem [shape: f32[8,8], index: 3, kind: input, shape index: {}]
  %s4 = inlined_call_operand.hbm [shape: f32[32,32], index: 4, kind: input, shape index: {}]
  %s5 = inlined_call_operand.hbm [shape: f32[32,32], index: 5, kind: input, shape index: {}]
  %s6 = inlined_call_operand.hbm [shape: f32[32,32], index: 6, kind: input, shape index: {}]
  %s7 = inlined_call_operand.hbm [shape: f32[8,32], index: 7, kind: output, shape index: {0}]
  %s8 = inlined_call_operand.hbm [shape: f32[8,8], index: 8, kind: output, shape index: {1}]
  %9 = xla_tuple %s7, %s8
  %s10 = sld [smem:[#allocation0]]
  $region70: #{tpu_custom_call.1} parent=0
    _
  %s12 = ssub.s32 1, %s10
  %s13 = scalar_select 0, %s12, %s10
  $region1: #{tpu_custom_call.1} parent=0
    #allocation2 [shape = 'u8[4096]{0}', space=vmem, size = 0x1000, scoped, tag = 'input window, operand 0, single buffered']
    #allocation3 [shape = 's32[1]{0}', space=sflag, size = 0x4, scoped, tag = 'scoped memory for tpu_custom_call.1']
    #allocation4 [shape = 's32[1]{0}', space=sflag, size = 0x4, scoped, tag = 'scoped memory for tpu_custom_call.1']
    #allocation5 [shape = 'u8[4096]{0}', space=vmem, size = 0x1000, scoped, tag = 'input window, operand 1, single buffered']
    #allocation6 [shape = 's32[1]{0}', space=sflag, size = 0x4, scoped, tag = 'scoped memory for tpu_custom_call.1']
    #allocation7 [shape = 'u8[32768]{0}', space=vmem, size = 0x8000, scoped, tag = 'input window, operand 2, single buffered']
    #allocation8 [shape = 'u8[16384]{0}', space=vmem, size = 0x4000, scoped, tag = 'input window, operand 4, single buffered']
    #allocation9 [shape = 's32[1]{0}', space=sflag, size = 0x4, scoped, tag = 'scoped memory for tpu_custom_call.1']
    #allocation10 [shape = 'u8[16384]{0}', space=vmem, size = 0x4000, scoped, tag = 'input window, operand 5, single buffered']
    #allocation11 [shape = 'u8[16384]{0}', space=vmem, size = 0x4000, scoped, tag = 'input window, operand 6, single buffered']
    #allocation12 [shape = 's32[1]{0}', space=sflag, size = 0x4, scoped, tag = 'scoped memory for tpu_custom_call.1']
    #allocation13 [shape = 'u8[4096]{0}', space=vmem, size = 0x1000, scoped, tag = 'output window, operand 0, single buffered']
    #allocation14 [shape = 'u8[4096]{0}', space=vmem, size = 0x1000, scoped, tag = 'output window, operand 1, single buffered']
    #allocation15 [shape = 's32[1]{0}', space=sflag, size = 0x4, scoped, tag = 'scoped memory for tpu_custom_call.1']
    %14 = vsyncpa [#allocation3], 0
    %15 = vsyncpa [#allocation6], 0
    %16 = vsyncpa [#allocation9], 0
    %17 = vsyncpa [#allocation12], 0
    %18 = vsyncpa [#allocation4], 0
    %19 = vsyncpa [#allocation15], 0
    // Predicated region
    $region2: #{tpu_custom_call.1} parent=1 // pred_check
      _
    $region3: #{tpu_custom_call.1} parent=1 // pred_check_branch
      %21 = sbr.rel (0) target = $region5
    $region4: #{tpu_custom_call.1} parent=1 // pred_region
      %s23 = ssub.s32 128, 128
      %24 = vsyncadd [#allocation3], %s23
      %s26 = sshll.u32 [#allocation2], 4
      %s27 = int_to_ptr.vmem [resolvable:$true] %s26
      %29 = dma.hbm_to_vmem [thread:$0]  %s0, 128, %s27, [#allocation3]
    $region5: #{tpu_custom_call.1} parent=1 // pred_fallthru
      _
    // Predicated region
    $region6: #{tpu_custom_call.1} parent=1 // pred_check
      _
    $region7: #{tpu_custom_call.1} parent=1 // pred_check_branch
      %31 = sbr.rel (0) target = $region9
    $region8: #{tpu_custom_call.1} parent=1 // pred_region
      %s33 = ssub.s32 128, 128
      %34 = vsyncadd [#allocation6], %s33
      %s36 = sshll.u32 [#allocation5], 4
      %s37 = int_to_ptr.vmem [resolvable:$true] %s36
      %39 = dma.hbm_to_vmem [thread:$0]  %s1, 128, %s37, [#allocation6]
    $region9: #{tpu_custom_call.1} parent=1 // pred_fallthru
      _
    // Predicated region
    $region10: #{tpu_custom_call.1} parent=1 // pred_check
      _
    $region11: #{tpu_custom_call.1} parent=1 // pred_check_branch
      %41 = sbr.rel (0) target = $region13
    $region12: #{tpu_custom_call.1} parent=1 // pred_region
      %s43 = ssub.s32 1024, 1024
      %44 = vsyncadd [#allocation6], %s43
      %s45 = sshll.u32 [#allocation7], 4
      %s46 = int_to_ptr.vmem [resolvable:$true] %s45
      %51 = dma.hbm_to_vmem [thread:$0]  %s2, 1024, %s46, [#allocation6], 128, 128, 8
    $region13: #{tpu_custom_call.1} parent=1 // pred_fallthru
      _
    // Predicated region
    $region14: #{tpu_custom_call.1} parent=1 // pred_check
      _
    $region15: #{tpu_custom_call.1} parent=1 // pred_check_branch
      %53 = sbr.rel (0) target = $region17
    $region16: #{tpu_custom_call.1} parent=1 // pred_region
      _
    $region17: #{tpu_custom_call.1} parent=1 // pred_fallthru
      _
    // Predicated region
    $region18: #{tpu_custom_call.1} parent=1 // pred_check
      _
    $region19: #{tpu_custom_call.1} parent=1 // pred_check_branch
      %55 = sbr.rel (0) target = $region21
    $region20: #{tpu_custom_call.1} parent=1 // pred_region
      %s57 = ssub.s32 512, 512
      %58 = vsyncadd [#allocation9], %s57
      %s59 = sshll.u32 [#allocation8], 4
      %s60 = int_to_ptr.vmem [resolvable:$true] %s59
      %65 = dma.hbm_to_vmem [thread:$0]  %s4, 512, %s60, [#allocation9], 128, 128, 8
    $region21: #{tpu_custom_call.1} parent=1 // pred_fallthru
      _
    // Predicated region
    $region22: #{tpu_custom_call.1} parent=1 // pred_check
      _
    $region23: #{tpu_custom_call.1} parent=1 // pred_check_branch
      %67 = sbr.rel (0) target = $region25
    $region24: #{tpu_custom_call.1} parent=1 // pred_region
      %s69 = ssub.s32 512, 512
      %70 = vsyncadd [#allocation9], %s69
      %s71 = sshll.u32 [#allocation10], 4
      %s72 = int_to_ptr.vmem [resolvable:$true] %s71
      %77 = dma.hbm_to_vmem [thread:$0]  %s5, 512, %s72, [#allocation9], 128, 128, 8
    $region25: #{tpu_custom_call.1} parent=1 // pred_fallthru
      _
    // Predicated region
    $region26: #{tpu_custom_call.1} parent=1 // pred_check
      _
    $region27: #{tpu_custom_call.1} parent=1 // pred_check_branch
      %79 = sbr.rel (0) target = $region29
    $region28: #{tpu_custom_call.1} parent=1 // pred_region
      %s81 = ssub.s32 512, 512
      %82 = vsyncadd [#allocation12], %s81
      %s83 = sshll.u32 [#allocation11], 4
      %s84 = int_to_ptr.vmem [resolvable:$true] %s83
      %89 = dma.hbm_to_vmem [thread:$0]  %s6, 512, %s84, [#allocation12], 128, 128, 8
    $region29: #{tpu_custom_call.1} parent=1 // pred_fallthru
      _
    // Predicated region
    $region30: #{tpu_custom_call.1} parent=1 // pred_check
      _
    $region31: #{tpu_custom_call.1} parent=1 // pred_check_branch
      %91 = sbr.rel (0) target = $region33
    $region32: #{tpu_custom_call.1} parent=1 // pred_region
      %92 = dma.done [#allocation3], 128
    $region33: #{tpu_custom_call.1} parent=1 // pred_fallthru
      _
    // Predicated region
    $region34: #{tpu_custom_call.1} parent=1 // pred_check
      _
    $region35: #{tpu_custom_call.1} parent=1 // pred_check_branch
      %94 = sbr.rel (0) target = $region37
    $region36: #{tpu_custom_call.1} parent=1 // pred_region
      %95 = dma.done [#allocation6], 128
    $region37: #{tpu_custom_call.1} parent=1 // pred_fallthru
      _
    // Predicated region
    $region38: #{tpu_custom_call.1} parent=1 // pred_check
      _
    $region39: #{tpu_custom_call.1} parent=1 // pred_check_branch
      %97 = sbr.rel (0) target = $region41
    $region40: #{tpu_custom_call.1} parent=1 // pred_region
      %98 = dma.done [#allocation6], 1024
    $region41: #{tpu_custom_call.1} parent=1 // pred_fallthru
      _
    // Predicated region
    $region42: #{tpu_custom_call.1} parent=1 // pred_check
      _
    $region43: #{tpu_custom_call.1} parent=1 // pred_check_branch
      %100 = sbr.rel (0) target = $region45
    $region44: #{tpu_custom_call.1} parent=1 // pred_region
      %101 = dma.done [#allocation9], 512
    $region45: #{tpu_custom_call.1} parent=1 // pred_fallthru
      _
    // Predicated region
    $region46: #{tpu_custom_call.1} parent=1 // pred_check
      _
    $region47: #{tpu_custom_call.1} parent=1 // pred_check_branch
      %103 = sbr.rel (0) target = $region49
    $region48: #{tpu_custom_call.1} parent=1 // pred_region
      %104 = dma.done [#allocation9], 512
    $region49: #{tpu_custom_call.1} parent=1 // pred_fallthru
      _
    // Predicated region
    $region50: #{tpu_custom_call.1} parent=1 // pred_check
      _
    $region51: #{tpu_custom_call.1} parent=1 // pred_check_branch
      %106 = sbr.rel (0) target = $region53
    $region52: #{tpu_custom_call.1} parent=1 // pred_region
      %107 = dma.done [#allocation12], 512
    $region53: #{tpu_custom_call.1} parent=1 // pred_fallthru
      _
    %v108 = vld [vmem:[#allocation2] sm:$0xff]
    %v109 = vld [vmem:[#allocation5] sm:$0xff]
    %v110 = vld [vmem:[#allocation7] sm:$0xff]
    %v111 = vld [vmem:[#allocation7 + $0x8] sm:$0xff]
    %v112 = vld [vmem:[#allocation7 + $0x10] sm:$0xff]
    %v113 = vld [vmem:[#allocation7 + $0x18] sm:$0xff]
    %v114 = vld [vmem:[#allocation7 + $0x20] sm:$0xff]
    %v115 = vld [vmem:[#allocation7 + $0x28] sm:$0xff]
    %v116 = vld [vmem:[#allocation7 + $0x30] sm:$0xff]
    %v117 = vld [vmem:[#allocation7 + $0x38] sm:$0xff]
    %v118 = vld [vmem:[%s3] sm:$0xff]
    %v119 = vld [vmem:[#allocation8] sm:$0xff]
    %v120 = vld [vmem:[#allocation8 + $0x8] sm:$0xff]
    %v121 = vld [vmem:[#allocation8 + $0x10] sm:$0xff]
    %v122 = vld [vmem:[#allocation8 + $0x18] sm:$0xff]
    %vm123 = vcmask 261120
    %v125 = vsel %vm123, %v109, 0
    %127 = vmatprep.subr.mxu0 0.0
    %128 = vmatpush1.msra.mxu0 %v119
    %129 = vmatprep.subr.mxu0 0.0
    %130 = vmatpush1.msra.mxu0 %v120
    %131 = vmatprep.subr.mxu0 0.0
    %132 = vmatpush1.msra.mxu0 %v121
    %133 = vmatprep.subr.mxu0 0.0
    %134 = vmatpush1.msra.mxu0 %v122
    %135 = vmatprep.subr.mxu0 0.0
    %136 = vmatpush1.msra.mxu0 0.0
    %137 = vmatprep.subr.mxu0 0.0
    %138 = vmatpush1.msra.mxu0 0.0
    %139 = vmatprep.subr.mxu0 0.0
    %140 = vmatpush1.msra.mxu0 0.0
    %141 = vmatprep.subr.mxu0 0.0
    %142 = vmatpush1.msra.mxu0 0.0
    %143 = vmatprep.subr.mxu0 0.0
    %144 = vmatpush1.msra.mxu0 0.0
    %145 = vmatprep.subr.mxu0 0.0
    %146 = vmatpush1.msra.mxu0 0.0
    %147 = vmatprep.subr.mxu0 0.0
    %148 = vmatpush1.msra.mxu0 0.0
    %149 = vmatprep.subr.mxu0 0.0
    %150 = vmatpush1.msra.mxu0 0.0
    %151 = vmatprep.subr.mxu0 0.0
    %152 = vmatpush1.msra.mxu0 0.0
    %153 = vmatprep.subr.mxu0 0.0
    %154 = vmatpush1.msra.mxu0 0.0
    %155 = vmatprep.subr.mxu0 0.0
    %156 = vmatpush1.msra.mxu0 0.0
    %157 = vmatprep.subr.mxu0 0.0
    %158 = vmatpush1.msra.mxu0 0.0
    %159 = vmatprep.subr.mxu0 0.0
    %160 = vmatpush1.msra.mxu0 0.0
    %161 = vmatprep.subr.mxu0 0.0
    %162 = vmatpush1.msra.mxu0 0.0
    %163 = vmatprep.subr.mxu0 0.0
    %164 = vmatpush1.msra.mxu0 0.0
    %165 = vmatprep.subr.mxu0 0.0
    %166 = vmatpush1.msra.mxu0 0.0
    %167 = vmatprep.subr.mxu0 0.0
    %168 = vmatpush1.msra.mxu0 0.0
    %169 = vmatprep.subr.mxu0 0.0
    %170 = vmatpush1.msra.mxu0 0.0
    %171 = vmatprep.subr.mxu0 0.0
    %172 = vmatpush1.msra.mxu0 0.0
    %173 = vmatprep.subr.mxu0 0.0
    %174 = vmatpush1.msra.mxu0 0.0
    %175 = vmatprep.subr.mxu0 0.0
    %176 = vmatpush1.msra.mxu0 0.0
    %177 = vmatprep.subr.mxu0 0.0
    %178 = vmatpush1.msra.mxu0 0.0
    %179 = vmatprep.subr.mxu0 0.0
    %180 = vmatpush1.msra.mxu0 0.0
    %181 = vmatprep.subr.mxu0 0.0
    %182 = vmatpush1.msra.mxu0 0.0
    %183 = vmatprep.subr.mxu0 0.0
    %184 = vmatpush1.msra.mxu0 0.0
    %185 = vmatprep.subr.mxu0 0.0
    %186 = vmatpush1.msra.mxu0 0.0
    %187 = vmatprep.subr.mxu0 0.0
    %188 = vmatpush1.msra.mxu0 0.0
    %189 = vmatprep.subr.mxu0 0.0
    %190 = vmatpush1.msra.mxu0 0.0
    %191 = vmatprep.mubr.f32.mxu0 0.0
    %192 = vmatmul.mubr.f32.gmra.mrb[0].mxu0 %v125
    %v193 = vpop.f32.mrb[0].mxu0
    %v194 = vadd.f32 0.0, %v193
    %v195 = vpop.f32.mrb[0].mxu0
    %196 = vdwg.mxu0
    %v198 = vcombine.high %v194, %v194
    %v200 = vunpack.c.l.s4 1966171168
    %v201 = vunpack.c.0.s8 %v200
    %v202 = vlaneseq
    %v203 = vshrl.u32 %v202, 7
    %v204 = vsub.s32 %v201, %v203
    %v205 = vrot.slane %v194, %v204
    %v207 = vunpack.c.l.s4 1966171168
    %v208 = vunpack.c.0.s8 %v207
    %v209 = vlaneseq
    %v210 = vshrl.u32 %v209, 7
    %v211 = vsub.s32 %v208, %v210
    %v212 = vrot.slane %v198, %v211
    %v213 = vcombine.high %v205, %v205
    %v214 = vcombine.high %v212, %v212
    %v216 = vunpack.c.l.s4 1966171168
    %v217 = vunpack.c.0.s8 %v216
    %v218 = vlaneseq
    %v219 = vshrl.u32 %v218, 7
    %v220 = vsub.s32 %v217, %v219
    %v221 = vrot.slane %v205, %v220
    %v223 = vunpack.c.l.s4 1966171168
    %v224 = vunpack.c.0.s8 %v223
    %v225 = vlaneseq
    %v226 = vshrl.u32 %v225, 7
    %v227 = vsub.s32 %v224, %v226
    %v228 = vrot.slane %v212, %v227
    %v230 = vunpack.c.l.s4 1966171168
    %v231 = vunpack.c.0.s8 %v230
    %v232 = vlaneseq
    %v233 = vshrl.u32 %v232, 7
    %v234 = vsub.s32 %v231, %v233
    %v235 = vrot.slane %v213, %v234
    %v237 = vunpack.c.l.s4 1966171168
    %v238 = vunpack.c.0.s8 %v237
    %v239 = vlaneseq
    %v240 = vshrl.u32 %v239, 7
    %v241 = vsub.s32 %v238, %v240
    %v242 = vrot.slane %v214, %v241
    %v243 = vcombine.high %v221, %v221
    %v244 = vcombine.high %v228, %v228
    %v245 = vcombine.high %v235, %v235
    %v246 = vcombine.high %v242, %v242
    %v247 = vlaneseq
    %v248 = vshrl.u32 %v247, 7
    %v249 = vsub.s32 0, %v248
    %v250 = vrot.slane %v221, %v249
    %v251 = vlaneseq
    %v252 = vshrl.u32 %v251, 7
    %v253 = vsub.s32 0, %v252
    %v254 = vrot.slane %v235, %v253
    %v255 = vlaneseq
    %v256 = vshrl.u32 %v255, 7
    %v257 = vsub.s32 0, %v256
    %v258 = vrot.slane %v243, %v257
    %v259 = vlaneseq
    %v260 = vshrl.u32 %v259, 7
    %v261 = vsub.s32 0, %v260
    %v262 = vrot.slane %v245, %v261
    %v263 = vlaneseq
    %v264 = vshrl.u32 %v263, 7
    %v265 = vsub.s32 0, %v264
    %v266 = vrot.slane %v228, %v265
    %v267 = vlaneseq
    %v268 = vshrl.u32 %v267, 7
    %v269 = vsub.s32 0, %v268
    %v270 = vrot.slane %v242, %v269
    %v271 = vlaneseq
    %v272 = vshrl.u32 %v271, 7
    %v273 = vsub.s32 0, %v272
    %v274 = vrot.slane %v244, %v273
    %v275 = vlaneseq
    %v276 = vshrl.u32 %v275, 7
    %v277 = vsub.s32 0, %v276
    %v278 = vrot.slane %v246, %v277
    %v287 = vmul.f32 %v250, %v110
    %v288 = vmul.f32 %v254, %v111
    %v289 = vmul.f32 %v258, %v112
    %v290 = vmul.f32 %v262, %v113
    %v291 = vmul.f32 %v266, %v114
    %v292 = vmul.f32 %v270, %v115
    %v293 = vmul.f32 %v274, %v116
    %v294 = vmul.f32 %v278, %v117
    %v295 = vsel %vm123, %v287, 0.0
    %296 = vadd.xlane.f32.xlu0 %v295
    %v297 = vpop.xlane.xlu0 %296
    %v298 = vsel %vm123, %v288, 0.0
    %299 = vadd.xlane.f32.xlu0 %v298
    %v300 = vpop.xlane.xlu0 %299
    %v301 = vsel %vm123, %v289, 0.0
    %302 = vadd.xlane.f32.xlu0 %v301
    %v303 = vpop.xlane.xlu0 %302
    %v304 = vsel %vm123, %v290, 0.0
    %305 = vadd.xlane.f32.xlu0 %v304
    %v306 = vpop.xlane.xlu0 %305
    %v307 = vsel %vm123, %v291, 0.0
    %308 = vadd.xlane.f32.xlu0 %v307
    %v309 = vpop.xlane.xlu0 %308
    %v310 = vsel %vm123, %v292, 0.0
    %311 = vadd.xlane.f32.xlu0 %v310
    %v312 = vpop.xlane.xlu0 %311
    %v313 = vsel %vm123, %v293, 0.0
    %314 = vadd.xlane.f32.xlu0 %v313
    %v315 = vpop.xlane.xlu0 %314
    %v316 = vsel %vm123, %v294, 0.0
    %317 = vadd.xlane.f32.xlu0 %v316
    %v318 = vpop.xlane.xlu0 %317
    %vm319 = vcmp.gt.f32.partialorder %v118, 0.5
    %v328 = vlaneseq
    %v329 = vand.u32 %v328, 127
    %v330 = vlaneseq
    %v331 = vshrl.u32 %v330, 7
    %v332 = vsub.s32 %v329, %v331
    %v333 = vrot.slane %v297, %v332
    %v334 = vlaneseq
    %v335 = vshrl.u32 %v334, 7
    %v336 = vsub.s32 %v329, %v335
    %v337 = vrot.slane %v300, %v336
    %v338 = vlaneseq
    %v339 = vshrl.u32 %v338, 7
    %v340 = vsub.s32 %v329, %v339
    %v341 = vrot.slane %v303, %v340
    %v342 = vlaneseq
    %v343 = vshrl.u32 %v342, 7
    %v344 = vsub.s32 %v329, %v343
    %v345 = vrot.slane %v306, %v344
    %v346 = vlaneseq
    %v347 = vshrl.u32 %v346, 7
    %v348 = vsub.s32 %v329, %v347
    %v349 = vrot.slane %v309, %v348
    %v350 = vlaneseq
    %v351 = vshrl.u32 %v350, 7
    %v352 = vsub.s32 %v329, %v351
    %v353 = vrot.slane %v312, %v352
    %v354 = vlaneseq
    %v355 = vshrl.u32 %v354, 7
    %v356 = vsub.s32 %v329, %v355
    %v357 = vrot.slane %v315, %v356
    %v358 = vlaneseq
    %v359 = vshrl.u32 %v358, 7
    %v360 = vsub.s32 %v329, %v359
    %v361 = vrot.slane %v318, %v360
    %vm362 = vcmask 1041409
    %v363 = vsel %vm362, %v337, %v333
    %vm364 = vcmask 1042434
    %v365 = vsel %vm364, %v341, %v363
    %vm366 = vcmask 1043459
    %v367 = vsel %vm366, %v345, %v365
    %vm368 = vcmask 1044484
    %v369 = vsel %vm368, %v349, %v367
    %vm370 = vcmask 1045509
    %v371 = vsel %vm370, %v353, %v369
    %vm372 = vcmask 1046534
    %v373 = vsel %vm372, %v357, %v371
    %vm374 = vcmask 1047559
    %v375 = vsel %vm374, %v361, %v373
    %v377 = vsel %vm319, %v375, -1e+20
    %vm378 = vcmask 64512
    %v379 = vsel %vm378, %v377, -inf
    %380 = vmax.xlane.f32.xlu0 %v379
    %v381 = vpop.xlane.xlu0 %380
    %v382 = vsub.f32 %v377, %v381
    %v383 = vmul.f32 %v382, 1.442695
    %v384 = vpow.pop %v383
    %v385 = vsel %vm378, %v384, 0.0
    %386 = vadd.xlane.f32.xlu0 %v385
    %v387 = vpop.xlane.xlu0 %386
    %v388 = vrcp.pop %v387
    %v389 = vmul.f32 %v384, %v388
    %v390 = vlaneseq
    %v391 = vshrl.u32 %v390, 7
    %v392 = vsub.s32 0, %v391
    %v393 = vrot.slane %v389, %v392
    %395 = vbcast.lane.b32.xlu0 %v393, 256
    %v396 = vpop.permute.xlu0 %395
    %v397 = vlaneseq
    %v398 = vshrl.u32 %v397, 7
    %v399 = vsub.s32 1, %v398
    %v400 = vrot.slane %v389, %v399
    %402 = vbcast.lane.b32.xlu0 %v400, 256
    %v403 = vpop.permute.xlu0 %402
    %v404 = vlaneseq
    %v405 = vshrl.u32 %v404, 7
    %v406 = vsub.s32 2, %v405
    %v407 = vrot.slane %v389, %v406
    %409 = vbcast.lane.b32.xlu0 %v407, 256
    %v410 = vpop.permute.xlu0 %409
    %v411 = vlaneseq
    %v412 = vshrl.u32 %v411, 7
    %v413 = vsub.s32 3, %v412
    %v414 = vrot.slane %v389, %v413
    %416 = vbcast.lane.b32.xlu0 %v414, 256
    %v417 = vpop.permute.xlu0 %416
    %v418 = vlaneseq
    %v419 = vshrl.u32 %v418, 7
    %v420 = vsub.s32 4, %v419
    %v421 = vrot.slane %v389, %v420
    %423 = vbcast.lane.b32.xlu0 %v421, 256
    %v424 = vpop.permute.xlu0 %423
    %v425 = vlaneseq
    %v426 = vshrl.u32 %v425, 7
    %v427 = vsub.s32 5, %v426
    %v428 = vrot.slane %v389, %v427
    %430 = vbcast.lane.b32.xlu0 %v428, 256
    %v431 = vpop.permute.xlu0 %430
    %v432 = vlaneseq
    %v433 = vshrl.u32 %v432, 7
    %v434 = vsub.s32 6, %v433
    %v435 = vrot.slane %v389, %v434
    %437 = vbcast.lane.b32.xlu0 %v435, 256
    %v438 = vpop.permute.xlu0 %437
    %v439 = vlaneseq
    %v440 = vshrl.u32 %v439, 7
    %v441 = vsub.s32 7, %v440
    %v442 = vrot.slane %v389, %v441
    %444 = vbcast.lane.b32.xlu0 %v442, 256
    %v445 = vpop.permute.xlu0 %444
    %v446 = vmul.f32 %v396, %v110
    %v447 = vmul.f32 %v403, %v111
    %v448 = vmul.f32 %v410, %v112
    %v449 = vmul.f32 %v417, %v113
    %v450 = vmul.f32 %v424, %v114
    %v451 = vmul.f32 %v431, %v115
    %v452 = vmul.f32 %v438, %v116
    %v453 = vmul.f32 %v445, %v117
    %v454 = vsel %vm123, %v446, 0.0
    %v455 = vrot.slane %v454, 4
    %v456 = vadd.f32 %v454, %v455
    %v457 = vrot.slane %v456, 2
    %v458 = vadd.f32 %v456, %v457
    %v459 = vrot.slane %v458, 1
    %v460 = vadd.f32 %v458, %v459
    %v461 = vsel %vm123, %v447, 0.0
    %v462 = vrot.slane %v461, 4
    %v463 = vadd.f32 %v461, %v462
    %v464 = vrot.slane %v463, 2
    %v465 = vadd.f32 %v463, %v464
    %v466 = vrot.slane %v465, 1
    %v467 = vadd.f32 %v465, %v466
    %v468 = vsel %vm123, %v448, 0.0
    %v469 = vrot.slane %v468, 4
    %v470 = vadd.f32 %v468, %v469
    %v471 = vrot.slane %v470, 2
    %v472 = vadd.f32 %v470, %v471
    %v473 = vrot.slane %v472, 1
    %v474 = vadd.f32 %v472, %v473
    %v475 = vsel %vm123, %v449, 0.0
    %v476 = vrot.slane %v475, 4
    %v477 = vadd.f32 %v475, %v476
    %v478 = vrot.slane %v477, 2
    %v479 = vadd.f32 %v477, %v478
    %v480 = vrot.slane %v479, 1
    %v481 = vadd.f32 %v479, %v480
    %v482 = vsel %vm123, %v450, 0.0
    %v483 = vrot.slane %v482, 4
    %v484 = vadd.f32 %v482, %v483
    %v485 = vrot.slane %v484, 2
    %v486 = vadd.f32 %v484, %v485
    %v487 = vrot.slane %v486, 1
    %v488 = vadd.f32 %v486, %v487
    %v489 = vsel %vm123, %v451, 0.0
    %v490 = vrot.slane %v489, 4
    %v491 = vadd.f32 %v489, %v490
    %v492 = vrot.slane %v491, 2
    %v493 = vadd.f32 %v491, %v492
    %v494 = vrot.slane %v493, 1
    %v495 = vadd.f32 %v493, %v494
    %v496 = vsel %vm123, %v452, 0.0
    %v497 = vrot.slane %v496, 4
    %v498 = vadd.f32 %v496, %v497
    %v499 = vrot.slane %v498, 2
    %v500 = vadd.f32 %v498, %v499
    %v501 = vrot.slane %v500, 1
    %v502 = vadd.f32 %v500, %v501
    %v503 = vsel %vm123, %v453, 0.0
    %v504 = vrot.slane %v503, 4
    %v505 = vadd.f32 %v503, %v504
    %v506 = vrot.slane %v505, 2
    %v507 = vadd.f32 %v505, %v506
    %v508 = vrot.slane %v507, 1
    %v509 = vadd.f32 %v507, %v508
    %v510 = vld [vmem:[#allocation10] sm:$0xff]
    %v511 = vld [vmem:[#allocation10 + $0x8] sm:$0xff]
    %v512 = vld [vmem:[#allocation10 + $0x10] sm:$0xff]
    %v513 = vld [vmem:[#allocation10 + $0x18] sm:$0xff]
    %v514 = vld [vmem:[#allocation11] sm:$0xff]
    %v515 = vld [vmem:[#allocation11 + $0x8] sm:$0xff]
    %v516 = vld [vmem:[#allocation11 + $0x10] sm:$0xff]
    %v517 = vld [vmem:[#allocation11 + $0x18] sm:$0xff]
    %v526 = vsel %vm362, %v467, %v460
    %v527 = vsel %vm364, %v474, %v526
    %v528 = vsel %vm366, %v481, %v527
    %v529 = vsel %vm368, %v488, %v528
    %v530 = vsel %vm370, %v495, %v529
    %v531 = vsel %vm372, %v502, %v530
    %v532 = vsel %vm374, %v509, %v531
    %v533 = vsel %vm123, %v532, 0
    %535 = vmatprep.subr.mxu0 0.0
    %536 = vmatpush1.msra.mxu0 %v514
    %537 = vmatprep.subr.mxu0 0.0
    %538 = vmatpush1.msra.mxu0 %v515
    %539 = vmatprep.subr.mxu0 0.0
    %540 = vmatpush1.msra.mxu0 %v516
    %541 = vmatprep.subr.mxu0 0.0
    %542 = vmatpush1.msra.mxu0 %v517
    %543 = vmatprep.subr.mxu0 0.0
    %544 = vmatpush1.msra.mxu0 0.0
    %545 = vmatprep.subr.mxu0 0.0
    %546 = vmatpush1.msra.mxu0 0.0
    %547 = vmatprep.subr.mxu0 0.0
    %548 = vmatpush1.msra.mxu0 0.0
    %549 = vmatprep.subr.mxu0 0.0
    %550 = vmatpush1.msra.mxu0 0.0
    %551 = vmatprep.subr.mxu0 0.0
    %552 = vmatpush1.msra.mxu0 0.0
    %553 = vmatprep.subr.mxu0 0.0
    %554 = vmatpush1.msra.mxu0 0.0
    %555 = vmatprep.subr.mxu0 0.0
    %556 = vmatpush1.msra.mxu0 0.0
    %557 = vmatprep.subr.mxu0 0.0
    %558 = vmatpush1.msra.mxu0 0.0
    %559 = vmatprep.subr.mxu0 0.0
    %560 = vmatpush1.msra.mxu0 0.0
    %561 = vmatprep.subr.mxu0 0.0
    %562 = vmatpush1.msra.mxu0 0.0
    %563 = vmatprep.subr.mxu0 0.0
    %564 = vmatpush1.msra.mxu0 0.0
    %565 = vmatprep.subr.mxu0 0.0
    %566 = vmatpush1.msra.mxu0 0.0
    %567 = vmatprep.subr.mxu0 0.0
    %568 = vmatpush1.msra.mxu0 0.0
    %569 = vmatprep.subr.mxu0 0.0
    %570 = vmatpush1.msra.mxu0 0.0
    %571 = vmatprep.subr.mxu0 0.0
    %572 = vmatpush1.msra.mxu0 0.0
    %573 = vmatprep.subr.mxu0 0.0
    %574 = vmatpush1.msra.mxu0 0.0
    %575 = vmatprep.subr.mxu0 0.0
    %576 = vmatpush1.msra.mxu0 0.0
    %577 = vmatprep.subr.mxu0 0.0
    %578 = vmatpush1.msra.mxu0 0.0
    %579 = vmatprep.subr.mxu0 0.0
    %580 = vmatpush1.msra.mxu0 0.0
    %581 = vmatprep.subr.mxu0 0.0
    %582 = vmatpush1.msra.mxu0 0.0
    %583 = vmatprep.subr.mxu0 0.0
    %584 = vmatpush1.msra.mxu0 0.0
    %585 = vmatprep.subr.mxu0 0.0
    %586 = vmatpush1.msra.mxu0 0.0
    %587 = vmatprep.subr.mxu0 0.0
    %588 = vmatpush1.msra.mxu0 0.0
    %589 = vmatprep.subr.mxu0 0.0
    %590 = vmatpush1.msra.mxu0 0.0
    %591 = vmatprep.subr.mxu0 0.0
    %592 = vmatpush1.msra.mxu0 0.0
    %593 = vmatprep.subr.mxu0 0.0
    %594 = vmatpush1.msra.mxu0 0.0
    %595 = vmatprep.subr.mxu0 0.0
    %596 = vmatpush1.msra.mxu0 0.0
    %597 = vmatprep.subr.mxu0 0.0
    %598 = vmatpush1.msra.mxu0 0.0
    %599 = vmatprep.mubr.f32.mxu0 0.0
    %600 = vmatmul.mubr.f32.gmra.mrb[0].mxu0 %v533
    %v601 = vpop.f32.mrb[0].mxu0
    %v602 = vadd.f32 0.0, %v601
    %v603 = vpop.f32.mrb[0].mxu0
    %604 = vdwg.mxu0
    %v606 = vsel %vm123, %v108, 0
    %608 = vmatprep.subr.mxu0 0.0
    %609 = vmatpush1.msra.mxu0 %v510
    %610 = vmatprep.subr.mxu0 0.0
    %611 = vmatpush1.msra.mxu0 %v511
    %612 = vmatprep.subr.mxu0 0.0
    %613 = vmatpush1.msra.mxu0 %v512
    %614 = vmatprep.subr.mxu0 0.0
    %615 = vmatpush1.msra.mxu0 %v513
    %616 = vmatprep.subr.mxu0 0.0
    %617 = vmatpush1.msra.mxu0 0.0
    %618 = vmatprep.subr.mxu0 0.0
    %619 = vmatpush1.msra.mxu0 0.0
    %620 = vmatprep.subr.mxu0 0.0
    %621 = vmatpush1.msra.mxu0 0.0
    %622 = vmatprep.subr.mxu0 0.0
    %623 = vmatpush1.msra.mxu0 0.0
    %624 = vmatprep.subr.mxu0 0.0
    %625 = vmatpush1.msra.mxu0 0.0
    %626 = vmatprep.subr.mxu0 0.0
    %627 = vmatpush1.msra.mxu0 0.0
    %628 = vmatprep.subr.mxu0 0.0
    %629 = vmatpush1.msra.mxu0 0.0
    %630 = vmatprep.subr.mxu0 0.0
    %631 = vmatpush1.msra.mxu0 0.0
    %632 = vmatprep.subr.mxu0 0.0
    %633 = vmatpush1.msra.mxu0 0.0
    %634 = vmatprep.subr.mxu0 0.0
    %635 = vmatpush1.msra.mxu0 0.0
    %636 = vmatprep.subr.mxu0 0.0
    %637 = vmatpush1.msra.mxu0 0.0
    %638 = vmatprep.subr.mxu0 0.0
    %639 = vmatpush1.msra.mxu0 0.0
    %640 = vmatprep.subr.mxu0 0.0
    %641 = vmatpush1.msra.mxu0 0.0
    %642 = vmatprep.subr.mxu0 0.0
    %643 = vmatpush1.msra.mxu0 0.0
    %644 = vmatprep.subr.mxu0 0.0
    %645 = vmatpush1.msra.mxu0 0.0
    %646 = vmatprep.subr.mxu0 0.0
    %647 = vmatpush1.msra.mxu0 0.0
    %648 = vmatprep.subr.mxu0 0.0
    %649 = vmatpush1.msra.mxu0 0.0
    %650 = vmatprep.subr.mxu0 0.0
    %651 = vmatpush1.msra.mxu0 0.0
    %652 = vmatprep.subr.mxu0 0.0
    %653 = vmatpush1.msra.mxu0 0.0
    %654 = vmatprep.subr.mxu0 0.0
    %655 = vmatpush1.msra.mxu0 0.0
    %656 = vmatprep.subr.mxu0 0.0
    %657 = vmatpush1.msra.mxu0 0.0
    %658 = vmatprep.subr.mxu0 0.0
    %659 = vmatpush1.msra.mxu0 0.0
    %660 = vmatprep.subr.mxu0 0.0
    %661 = vmatpush1.msra.mxu0 0.0
    %662 = vmatprep.subr.mxu0 0.0
    %663 = vmatpush1.msra.mxu0 0.0
    %664 = vmatprep.subr.mxu0 0.0
    %665 = vmatpush1.msra.mxu0 0.0
    %666 = vmatprep.subr.mxu0 0.0
    %667 = vmatpush1.msra.mxu0 0.0
    %668 = vmatprep.subr.mxu0 0.0
    %669 = vmatpush1.msra.mxu0 0.0
    %670 = vmatprep.subr.mxu0 0.0
    %671 = vmatpush1.msra.mxu0 0.0
    %672 = vmatprep.mubr.f32.mxu0 0.0
    %673 = vmatmul.mubr.f32.gmra.mrb[0].mxu0 %v606
    %v674 = vpop.f32.mrb[0].mxu0
    %v675 = vadd.f32 %v602, %v674
    %v676 = vpop.f32.mrb[0].mxu0
    %677 = vdwg.mxu0
    %v678 = vtanh.pop %v675
    %679 = vst.msk [vmem:[#allocation13] sm:$0xff] %vm123, %v678
    %680 = vst.msk [vmem:[#allocation14] sm:$0xff] %vm378, %v389
    // Predicated region
    $region54: #{tpu_custom_call.1} parent=1 // pred_check
      _
    $region55: #{tpu_custom_call.1} parent=1 // pred_check_branch
      %682 = sbr.rel (0) target = $region57
    $region56: #{tpu_custom_call.1} parent=1 // pred_region
      %s684 = ssub.s32 128, 128
      %685 = vsyncadd [#allocation4], %s684
      %s687 = sshll.u32 [#allocation13], 4
      %s688 = int_to_ptr.vmem [resolvable:$true] %s687
      %690 = dma.vmem_to_hbm [thread:$0]  %s688, 128, %s7, [#allocation4]
    $region57: #{tpu_custom_call.1} parent=1 // pred_fallthru
      _
    // Predicated region
    $region58: #{tpu_custom_call.1} parent=1 // pred_check
      _
    $region59: #{tpu_custom_call.1} parent=1 // pred_check_branch
      %692 = sbr.rel (0) target = $region61
    $region60: #{tpu_custom_call.1} parent=1 // pred_region
      %s694 = ssub.s32 128, 128
      %695 = vsyncadd [#allocation15], %s694
      %s697 = sshll.u32 [#allocation14], 4
      %s698 = int_to_ptr.vmem [resolvable:$true] %s697
      %700 = dma.vmem_to_hbm [thread:$0]  %s698, 128, %s8, [#allocation15]
    $region61: #{tpu_custom_call.1} parent=1 // pred_fallthru
      _
    // Predicated region
    $region62: #{tpu_custom_call.1} parent=1 // pred_check
      _
    $region63: #{tpu_custom_call.1} parent=1 // pred_check_branch
      %702 = sbr.rel (0) target = $region65
    $region64: #{tpu_custom_call.1} parent=1 // pred_region
      %703 = dma.done [#allocation4], 128
    $region65: #{tpu_custom_call.1} parent=1 // pred_fallthru
      _
    // Predicated region
    $region66: #{tpu_custom_call.1} parent=1 // pred_check
      _
    $region67: #{tpu_custom_call.1} parent=1 // pred_check_branch
      %705 = sbr.rel (0) target = $region69
    $region68: #{tpu_custom_call.1} parent=1 // pred_region
      %706 = dma.done [#allocation15], 128
    $region69: #{tpu_custom_call.1} parent=1 // pred_fallthru
      _
    %707 = vsyncpa [#allocation3], 1
    %708 = vsyncpa [#allocation6], 1
    %709 = vsyncpa [#allocation9], 1
    %710 = vsyncpa [#allocation12], 1
    %711 = vsyncpa [#allocation4], 1
    %712 = vsyncpa [#allocation15], 1

</llo_original>
